<compile_context>
chip_gen: v7x
topology: tpu7x:2x2x1
jax: 0.10.0
libtpu: 0.0.40
codegen_flags: <defaults>
</compile_context>

<pallas_src>
import jax
import jax.numpy as jnp
from jax.experimental import pallas as pl
from jax.experimental.pallas import tpu as pltpu

_MIB = 1024 * 1024


def _vmem_capacity_bytes():
    """Per-core VMEM capacity; conservative 64 MiB (v7x) fallback if query fails."""
    try:
        return int(pltpu.get_tpu_info().vmem_capacity_bytes)
    except Exception:
        return 64 * _MIB


def _mosaic_params(block_bytes, n_axes):
    """Size the scoped-VMEM limit to the actual double-buffered footprint
    (2 in + 2 out tiles) plus headroom, clamped below physical VMEM."""
    vmem_cap = _vmem_capacity_bytes()
    limit = max(4 * int(block_bytes) + 8 * _MIB, 16 * _MIB)
    limit = max(8 * _MIB, min(limit, vmem_cap - 8 * _MIB))
    return pltpu.CompilerParams(
        dimension_semantics=("parallel",) * n_axes,
        vmem_limit_bytes=int(limit),
    )


# --------------------------------------------------------------------------
# Kernels
# --------------------------------------------------------------------------
def scse_fused_kernel(x_ref, w1_ref, b1_ref, w2t_ref, b2_ref, wse_ref, bse_ref, o_ref):
    """Whole-sample block (1, C, HW): pooling + cSE FCs + sSE + apply, single pass."""
    x = x_ref[0].astype(jnp.float32)                                  # (C, HW)

    # cSE: avg-pool over HW (XLU lane reduce) -> FC(C->Cr) -> ReLU -> FC(Cr->C) -> sigmoid.
    # Both FCs are tiny (Cr << C); done as VPU mul + reduce (no degenerate MXU shapes).
    pooled = jnp.mean(x, axis=1, keepdims=True)                       # (C, 1)
    h = jnp.maximum(
        jnp.sum(pooled * w1_ref[...], axis=0, keepdims=True) + b1_ref[...], 0.0)  # (1, Cr)
    cse_logit = jnp.sum(w2t_ref[...] * h, axis=1, keepdims=True) + b2_ref[...]    # (C, 1)
    cse = jax.nn.sigmoid(cse_logit)                                   # (C, 1)

    # sSE: per-pixel channel reduce (sublanes) + EUP sigmoid.
    sse = jax.nn.sigmoid(
        jnp.sum(x * wse_ref[...], axis=0, keepdims=True) + bse_ref[0])  # (1, HW)

    # x*cse + x*sse == x*(cse+sse)  (reassociated; identical within fp tolerance)
    o_ref[0] = (x * (cse + sse)).astype(o_ref.dtype)


def scse_apply_kernel(x_ref, cse_ref, wse_ref, bse_ref, o_ref):
    """Spatially tiled apply: x block (1, C, THW), cSE scale precomputed outside."""
    x = x_ref[0].astype(jnp.float32)                                  # (C, THW)
    cse = cse_ref[0]                                                  # (C, 1) f32
    sse = jax.nn.sigmoid(
        jnp.sum(x * wse_ref[...], axis=0, keepdims=True) + bse_ref[0])  # (1, THW)
    o_ref[0] = (x * (cse + sse)).astype(o_ref.dtype)


# --------------------------------------------------------------------------
# Wrapper
# --------------------------------------------------------------------------
def _choose_thw(HW, C, itemsize, tile_bytes):
    """Largest multiple of 128 such that a (C, THW) tile fits in tile_bytes,
    clamped to HW rounded up to 128. No divisibility requirement: the grid uses
    pl.cdiv and Pallas masks the ragged final block."""
    hw_pad = pl.cdiv(HW, 128) * 128
    cap = max(128, (int(tile_bytes) // max(C * itemsize, 1)) // 128 * 128)
    return int(min(cap, hw_pad))


def scse_attention(x_nchw, params, *, tile_bytes=None, fused=None):
    """x_nchw: (N, C, H, W) float32 or bfloat16. Returns (N, C, H, W) in x's dtype."""
    N, C, H, W = x_nchw.shape
    HW = H * W
    in_dtype = x_nchw.dtype
    itemsize = jnp.dtype(in_dtype).itemsize

    vmem_cap = _vmem_capacity_bytes()
    if tile_bytes is None:
        # 2-4 MiB tiles are past the bandwidth knee on all generations and keep the
        # double-buffered footprint well inside v7x's 64 MiB VMEM.
        tile_bytes = min(4 * _MIB, max(_MIB, vmem_cap // 16))

    # Free reshape: keep native NCHW layout, flatten spatial dims onto lanes.
    x = x_nchw.reshape(N, C, HW)

    w1 = params["w1"].astype(jnp.float32)     # (C, Cr)
    b1 = params["b1"].astype(jnp.float32)     # (1, Cr)
    w2 = params["w2"].astype(jnp.float32)     # (Cr, C)
    b2 = params["b2"].astype(jnp.float32)     # (1, C)
    wse = params["wse"].astype(jnp.float32)   # (C, 1)
    bse = params["bse"].astype(jnp.float32)   # (1,)

    sample_bytes = C * HW * itemsize
    if fused is None:
        fused = sample_bytes <= tile_bytes

    if fused:
        # ---- single-pass fused path: whole sample resident in VMEM per grid step ----
        w2t = w2.T                    # (C, Cr): lane-reduce layout for the second FC
        b2c = b2.reshape(C, 1)
        out = pl.pallas_call(
            scse_fused_kernel,
            out_shape=jax.ShapeDtypeStruct((N, C, HW), in_dtype),
            grid_spec=pltpu.PrefetchScalarGridSpec(
                num_scalar_prefetch=0,
                grid=(N,),
                in_specs=[
                    pl.BlockSpec((1, C, HW), lambda n: (n, 0, 0)),     # x (whole sample)
                    pl.BlockSpec(w1.shape,   lambda n: (0, 0)),        # w1 (C, Cr)
                    pl.BlockSpec(b1.shape,   lambda n: (0, 0)),        # b1 (1, Cr)
                    pl.BlockSpec(w2t.shape,  lambda n: (0, 0)),        # w2^T (C, Cr)
                    pl.BlockSpec(b2c.shape,  lambda n: (0, 0)),        # b2 (C, 1)
                    pl.BlockSpec(wse.shape,  lambda n: (0, 0)),        # wse (C, 1)
                    pl.BlockSpec((1,),       lambda n: (0,),           # bse scalar -> SMEM
                                 memory_space=pltpu.MemorySpace.SMEM),
                ],
                out_specs=pl.BlockSpec((1, C, HW), lambda n: (n, 0, 0)),
            ),
            compiler_params=_mosaic_params(sample_bytes, 1),
        )(x, w1, b1, w2t, b2c, wse, bse)
        return out.reshape(N, C, H, W)

    # ---- two-pass path for large feature maps ----
    # cSE branch hoisted to plain JAX (tiny: O(N*C) work).
    x32 = x.astype(jnp.float32)
    pooled = jnp.mean(x32, axis=2)                                    # (N, C)
    h = jnp.maximum(pooled @ w1 + b1, 0.0)                            # (N, Cr)
    cse = jax.nn.sigmoid(h @ w2 + b2)[:, :, None]                     # (N, C, 1) f32

    thw = _choose_thw(HW, C, itemsize, tile_bytes)
    n_hw = pl.cdiv(HW, thw)
    block_bytes = C * thw * itemsize

    out = pl.pallas_call(
        scse_apply_kernel,
        out_shape=jax.ShapeDtypeStruct((N, C, HW), in_dtype),
        grid_spec=pltpu.PrefetchScalarGridSpec(
            num_scalar_prefetch=0,
            # Flat parallel axis (N*n_hw) so both v7x TensorCores get work.
            grid=(N * n_hw,),
            in_specs=[
                pl.BlockSpec((1, C, thw), lambda i: (i // n_hw, 0, i % n_hw)),  # x tile
                pl.BlockSpec((1, C, 1),   lambda i: (i // n_hw, 0, 0)),         # cse scale
                pl.BlockSpec((C, 1),      lambda i: (0, 0)),                    # wse
                pl.BlockSpec((1,),        lambda i: (0,),                       # bse -> SMEM
                             memory_space=pltpu.MemorySpace.SMEM),
            ],
            out_specs=pl.BlockSpec((1, C, thw), lambda i: (i // n_hw, 0, i % n_hw)),
        ),
        compiler_params=_mosaic_params(block_bytes, 1),
    )(x, cse, wse, bse)
    return out.reshape(N, C, H, W)


# --------------------------------------------------------------------------
# Params / reference
# --------------------------------------------------------------------------
def init_scse_params(key, in_channels, reduction=16):
    cr = max(in_channels // reduction, 1)
    k1, k2, k3, k4, k5, k6 = jax.random.split(key, 6)
    scale = 0.1
    return {
        # 1x1 conv (C -> Cr): stored as (C, Cr) so matmul is x @ w
        "w1":  (scale * jax.random.normal(k1, (in_channels, cr))).astype(jnp.float32),
        "b1":  (scale * jax.random.normal(k2, (1, cr))).astype(jnp.float32),
        # 1x1 conv (Cr -> C)
        "w2":  (scale * jax.random.normal(k3, (cr, in_channels))).astype(jnp.float32),
        "b2":  (scale * jax.random.normal(k4, (1, in_channels))).astype(jnp.float32),
        # 1x1 conv (C -> 1) for sSE
        "wse": (scale * jax.random.normal(k5, (in_channels, 1))).astype(jnp.float32),
        "bse": (scale * jax.random.normal(k6, (1,))).astype(jnp.float32),
    }


def scse_reference(x_nchw, params):
    """Pure-JAX reference mirroring the PyTorch SCSEModule forward (NCHW)."""
    pooled = jnp.mean(x_nchw, axis=(2, 3))                             # (N, C)
    h = jnp.maximum(pooled @ params["w1"] + params["b1"], 0.0)         # (N, Cr)
    cse = jax.nn.sigmoid(h @ params["w2"] + params["b2"])              # (N, C)
    sse = jax.nn.sigmoid(
        jnp.einsum("nchw,c->nhw", x_nchw, params["wse"][:, 0]) + params["bse"][0])
    return x_nchw * cse[:, :, None, None] + x_nchw * sse[:, None, :, :]


if __name__ == "__main__":
    key = jax.random.PRNGKey(0)
    kx, kx2, kp = jax.random.split(key, 3)

    # Attention(name='scse', in_channels=32), reduction=16 -> hidden=2
    N, C, H, W = 2, 32, 16, 16
    x = jax.random.normal(kx, (N, C, H, W), dtype=jnp.float32)
    params = init_scse_params(kp, in_channels=C, reduction=16)
    ref = scse_reference(x, params)

    # 1) Fused single-pass path (sample fits in VMEM).
    out_fused = jax.block_until_ready(scse_attention(x, params))
    assert out_fused.shape == (N, C, H, W)
    assert jnp.allclose(out_fused, ref, atol=1e-5, rtol=1e-5), "mismatch (fused) vs reference"

    # 2) Two-pass tiled path, forced (exercises the large-map code path).
    out_tiled = jax.block_until_ready(scse_attention(x, params, fused=False))
    assert jnp.allclose(out_tiled, ref, atol=1e-5, rtol=1e-5), "mismatch (tiled) vs reference"

    # 3) Ragged spatial extent (HW not 128-aligned) -> masked final block in the tiled path.
    H2, W2 = 10, 15
    x2 = jax.random.normal(kx2, (N, C, H2, W2), dtype=jnp.float32)
    ref2 = scse_reference(x2, params)
    out2 = jax.block_until_ready(
        scse_attention(x2, params, fused=False, tile_bytes=16 * 1024))
    assert jnp.allclose(out2, ref2, atol=1e-5, rtol=1e-5), "mismatch (ragged tiled) vs reference"

    # 4) bf16 I/O path (halved HBM traffic); compute stays in f32 inside the kernel.
    x_bf = x.astype(jnp.bfloat16)
    ref_bf = scse_reference(x_bf.astype(jnp.float32), params)
    out_bf = jax.block_until_ready(scse_attention(x_bf, params))
    assert out_bf.dtype == jnp.bfloat16
    assert jnp.allclose(out_bf.astype(jnp.float32), ref_bf, atol=5e-2, rtol=5e-2), \
        "mismatch (bf16) vs reference"

    print("KERNEL_OK")
</pallas_src>

<mosaic_0001>
module attributes {stable_mosaic.version = 11 : i64} {
  func.func @scse_fused_kernel(%arg0: i32, %arg1: memref<1x32x256xf32, #tpu.memory_space<vmem>>, %arg2: memref<32x2xf32, #tpu.memory_space<vmem>>, %arg3: memref<1x2xf32, #tpu.memory_space<vmem>>, %arg4: memref<32x2xf32, #tpu.memory_space<vmem>>, %arg5: memref<32x1xf32, #tpu.memory_space<vmem>>, %arg6: memref<32x1xf32, #tpu.memory_space<vmem>>, %arg7: memref<1xf32, #tpu.memory_space<smem>>, %arg8: memref<1x32x256xf32, #tpu.memory_space<vmem>>) attributes {dimension_semantics = [#tpu.dimension_semantics<parallel>], iteration_bounds = array<i64: 2>, scalar_prefetch = 0 : i64, scratch_operands = 0 : i64, tpu.core_type = #tpu.core_type<tc>, window_params = [{transform_indices = @transform_0, window_bounds = array<i64: 1, 32, 256>}, {pipeline_mode = #tpu.pipeline_mode<synchronous>, transform_indices = @transform_1, window_bounds = array<i64: 32, 2>}, {pipeline_mode = #tpu.pipeline_mode<synchronous>, transform_indices = @transform_2, window_bounds = array<i64: 1, 2>}, {pipeline_mode = #tpu.pipeline_mode<synchronous>, transform_indices = @transform_3, window_bounds = array<i64: 32, 2>}, {pipeline_mode = #tpu.pipeline_mode<synchronous>, transform_indices = @transform_4, window_bounds = array<i64: 32, 1>}, {pipeline_mode = #tpu.pipeline_mode<synchronous>, transform_indices = @transform_5, window_bounds = array<i64: 32, 1>}, {transform_indices = @transform_6, window_bounds = array<i64: 1>}, {transform_indices = @transform_7, window_bounds = array<i64: 1, 32, 256>}]} {
    %c0 = arith.constant 0 : index
    %c0_0 = arith.constant 0 : index
    %c0_1 = arith.constant 0 : index
    %0 = vector.load %arg1[%c0, %c0_0, %c0_1] : memref<1x32x256xf32, #tpu.memory_space<vmem>>, vector<1x32x256xf32>
    %1 = vector.shape_cast %0 : vector<1x32x256xf32> to vector<32x256xf32>
    %cst = arith.constant dense<0.000000e+00> : vector<32xf32>
    %2 = vector.multi_reduction <add>, %1, %cst [1] : vector<32x256xf32> to vector<32xf32>
    %3 = vector.shape_cast %2 : vector<32xf32> to vector<32x1xf32>
    %cst_2 = arith.constant 2.560000e+02 : f32
    %4 = vector.broadcast %cst_2 : f32 to vector<32x1xf32>
    %5 = arith.divf %3, %4 : vector<32x1xf32>
    %c0_3 = arith.constant 0 : index
    %c0_4 = arith.constant 0 : index
    %6 = vector.load %arg2[%c0_3, %c0_4] : memref<32x2xf32, #tpu.memory_space<vmem>>, vector<32x2xf32>
    %7 = vector.broadcast %5 : vector<32x1xf32> to vector<32x2xf32>
    %8 = arith.mulf %7, %6 : vector<32x2xf32>
    %cst_5 = arith.constant dense<0.000000e+00> : vector<2xf32>
    %9 = vector.multi_reduction <add>, %8, %cst_5 [0] : vector<32x2xf32> to vector<2xf32>
    %10 = vector.shape_cast %9 : vector<2xf32> to vector<1x2xf32>
    %c0_6 = arith.constant 0 : index
    %c0_7 = arith.constant 0 : index
    %11 = vector.load %arg3[%c0_6, %c0_7] : memref<1x2xf32, #tpu.memory_space<vmem>>, vector<1x2xf32>
    %12 = arith.addf %10, %11 : vector<1x2xf32>
    %cst_8 = arith.constant 0.000000e+00 : f32
    %13 = vector.broadcast %cst_8 : f32 to vector<1x2xf32>
    %14 = arith.maximumf %12, %13 : vector<1x2xf32>
    %c0_9 = arith.constant 0 : index
    %c0_10 = arith.constant 0 : index
    %15 = vector.load %arg4[%c0_9, %c0_10] : memref<32x2xf32, #tpu.memory_space<vmem>>, vector<32x2xf32>
    %16 = vector.broadcast %14 : vector<1x2xf32> to vector<32x2xf32>
    %17 = arith.mulf %15, %16 : vector<32x2xf32>
    %cst_11 = arith.constant dense<0.000000e+00> : vector<32xf32>
    %18 = vector.multi_reduction <add>, %17, %cst_11 [1] : vector<32x2xf32> to vector<32xf32>
    %19 = vector.shape_cast %18 : vector<32xf32> to vector<32x1xf32>
    %c0_12 = arith.constant 0 : index
    %c0_13 = arith.constant 0 : index
    %20 = vector.load %arg5[%c0_12, %c0_13] : memref<32x1xf32, #tpu.memory_space<vmem>>, vector<32x1xf32>
    %21 = arith.addf %19, %20 : vector<32x1xf32>
    %22 = arith.negf %21 : vector<32x1xf32>
    %23 = math.exp %22 : vector<32x1xf32>
    %cst_14 = arith.constant 1.000000e+00 : f32
    %24 = vector.broadcast %cst_14 : f32 to vector<32x1xf32>
    %25 = arith.addf %24, %23 : vector<32x1xf32>
    %26 = arith.divf %24, %25 : vector<32x1xf32>
    %c0_15 = arith.constant 0 : index
    %c0_16 = arith.constant 0 : index
    %27 = vector.load %arg6[%c0_15, %c0_16] : memref<32x1xf32, #tpu.memory_space<vmem>>, vector<32x1xf32>
    %28 = vector.broadcast %27 : vector<32x1xf32> to vector<32x256xf32>
    %29 = arith.mulf %1, %28 : vector<32x256xf32>
    %cst_17 = arith.constant dense<0.000000e+00> : vector<256xf32>
    %30 = vector.multi_reduction <add>, %29, %cst_17 [0] : vector<32x256xf32> to vector<256xf32>
    %31 = vector.shape_cast %30 : vector<256xf32> to vector<1x256xf32>
    %c0_18 = arith.constant 0 : index
    %32 = memref.load %arg7[%c0_18] : memref<1xf32, #tpu.memory_space<smem>>
    %33 = vector.broadcast %32 : f32 to vector<1x256xf32>
    %34 = arith.addf %31, %33 : vector<1x256xf32>
    %35 = arith.negf %34 : vector<1x256xf32>
    %36 = math.exp %35 : vector<1x256xf32>
    %cst_19 = arith.constant 1.000000e+00 : f32
    %37 = vector.broadcast %cst_19 : f32 to vector<1x256xf32>
    %38 = arith.addf %37, %36 : vector<1x256xf32>
    %39 = arith.divf %37, %38 : vector<1x256xf32>
    %40 = vector.broadcast %26 : vector<32x1xf32> to vector<32x256xf32>
    %41 = vector.broadcast %39 : vector<1x256xf32> to vector<32x256xf32>
    %42 = arith.addf %40, %41 : vector<32x256xf32>
    %43 = arith.mulf %1, %42 : vector<32x256xf32>
    %c0_20 = arith.constant 0 : index
    %c0_21 = arith.constant 0 : index
    %c0_22 = arith.constant 0 : index
    %44 = vector.load %arg8[%c0_20, %c0_21, %c0_22] : memref<1x32x256xf32, #tpu.memory_space<vmem>>, vector<1x32x256xf32>
    %45 = vector.shape_cast %44 : vector<1x32x256xf32> to vector<32x256xf32>
    %46 = vector.shape_cast %43 : vector<32x256xf32> to vector<1x32x256xf32>
    tpu.vector_store %arg8[%c0_20, %c0_21, %c0_22], %46 {strides = array<i32>} : memref<1x32x256xf32, #tpu.memory_space<vmem>>, vector<1x32x256xf32>,
    return
  }
  func.func @transform_0(%arg0: i32) -> (i32, i32, i32) {
    %c0_i32 = arith.constant 0 : i32
    %c0_i32_0 = arith.constant 0 : i32
    %c0_i32_1 = arith.constant 0 : i32
    return %arg0, %c0_i32, %c0_i32_0 : i32, i32, i32
  }
  func.func @transform_1(%arg0: i32) -> (i32, i32) {
    %c0_i32 = arith.constant 0 : i32
    %c0_i32_0 = arith.constant 0 : i32
    %c0_i32_1 = arith.constant 0 : i32
    return %c0_i32, %c0_i32_0 : i32, i32
  }
  func.func @transform_2(%arg0: i32) -> (i32, i32) {
    %c0_i32 = arith.constant 0 : i32
    %c0_i32_0 = arith.constant 0 : i32
    %c0_i32_1 = arith.constant 0 : i32
    return %c0_i32, %c0_i32_0 : i32, i32
  }
  func.func @transform_3(%arg0: i32) -> (i32, i32) {
    %c0_i32 = arith.constant 0 : i32
    %c0_i32_0 = arith.constant 0 : i32
    %c0_i32_1 = arith.constant 0 : i32
    return %c0_i32, %c0_i32_0 : i32, i32
  }
  func.func @transform_4(%arg0: i32) -> (i32, i32) {
    %c0_i32 = arith.constant 0 : i32
    %c0_i32_0 = arith.constant 0 : i32
    %c0_i32_1 = arith.constant 0 : i32
    return %c0_i32, %c0_i32_0 : i32, i32
  }
  func.func @transform_5(%arg0: i32) -> (i32, i32) {
    %c0_i32 = arith.constant 0 : i32
    %c0_i32_0 = arith.constant 0 : i32
    %c0_i32_1 = arith.constant 0 : i32
    return %c0_i32, %c0_i32_0 : i32, i32
  }
  func.func @transform_6(%arg0: i32) -> i32 {
    %c0_i32 = arith.constant 0 : i32
    %c0_i32_0 = arith.constant 0 : i32
    return %c0_i32 : i32
  }
  func.func @transform_7(%arg0: i32) -> (i32, i32, i32) {
    %c0_i32 = arith.constant 0 : i32
    %c0_i32_0 = arith.constant 0 : i32
    %c0_i32_1 = arith.constant 0 : i32
    return %arg0, %c0_i32, %c0_i32_0 : i32, i32, i32
  }
}

</mosaic_0001>

<llo_original>
// kernel: tpu_custom_call.1
$region0: #{tpu_custom_call.1}
  #allocation0 [shape = 'u32[]', space=smem, size = 0x4, offset = 0x4, fixed_abs, tag = 'smem constant byte address 0x4 - core index']
  #allocation1 [shape = 'u32[144,128]{1,0:T(1,128)}', space=vmem, size = 0x12000, scoped, tag = 'internal scratch']
  #allocation2 [shape = 'f32[1]{0:T(128)S(6)}', space=smem, size = 0x200, scoped, tag = 'scoped memory for tpu_custom_call.1']
  %s0 = inlined_call_operand.vmem [shape: f32[2,32,256], index: 0, kind: input, shape index: {}]
  %s1 = inlined_call_operand.vmem [shape: f32[32,2], index: 1, kind: input, shape index: {}]
  %s2 = inlined_call_operand.vmem [shape: f32[1,2], index: 2, kind: input, shape index: {}]
  %s3 = inlined_call_operand.vmem [shape: f32[32,2], index: 3, kind: input, shape index: {}]
  %s4 = inlined_call_operand.vmem [shape: f32[32,1], index: 4, kind: input, shape index: {}]
  %s5 = inlined_call_operand.vmem [shape: f32[32,1], index: 5, kind: input, shape index: {}]
  %s6 = inlined_call_operand.<no memory space> [shape: f32[1], index: 6, kind: input, shape index: {}]
  %s7 = inlined_call_operand.hbm [shape: f32[2,32,256], index: 7, kind: output, shape index: {}]
  %s8 = sld [smem:[#allocation0]]
  $region61: #{tpu_custom_call.1} parent=0
    _
  %s10 = ssub.s32 1, %s8
  %s11 = scalar_select 0, %s10, %s8
  %12 = sst [smem:[#allocation2]] %s6
  $region1: #{tpu_custom_call.1} parent=0
    #allocation3 [shape = 'u8[65536]{0}', space=vmem, size = 0x10000, scoped, tag = 'output window, operand 0']
    #allocation4 [shape = 's32[2]{0}', space=sflag, size = 0x8, scoped, tag = 'scoped memory for tpu_custom_call.1']
    %13 = vsyncpa [#allocation4], 0
    %s14 = scalar_lea.sflag [#allocation4], 1
    %15 = vsyncpa %s14, 0
    loop: start=0, step=1, limit=4
    $region2: #{tpu_custom_call.1} parent=1 // loop_pre_header
      _
    $region3: #{tpu_custom_call.1} parent=1 // loop_header
      %s17 = sphi 0, %s21
      %p18 = scmp.ge.s32.totalorder %s17, 4
      %s27 = sphi 0, %s29
      %s30 = sphi 0, %s27
      %s31 = sphi 0, %s30
      %s47 = sphi 0, %s31
      %s51 = sphi 0, %s51
      %s53 = sphi 0, %s51
      %s54 = sphi 0, %s53
      %s68 = sphi 0, %s54
      %s72 = sphi 0, %s72
      %s74 = sphi 0, %s72
      %s75 = sphi 0, %s74
      %s89 = sphi 0, %s75
      %s93 = sphi 0, %s93
      %s95 = sphi 0, %s93
      %s96 = sphi 0, %s95
      %s110 = sphi 0, %s96
      %s114 = sphi 0, %s114
      %s116 = sphi 0, %s114
      %s117 = sphi 0, %s116
      %s131 = sphi 0, %s117
      %s135 = sphi 0, %s135
      %s137 = sphi 0, %s135
      %s138 = sphi 0, %s137
      %s152 = sphi 0, %s138
      %s156 = sphi 0, %s156
      %s158 = sphi 0, %s156
      %s159 = sphi 0, %s158
      %s173 = sphi 0, %s159
      %s179 = sphi 0, %s181
      %s182 = sphi 0, %s179
      %s183 = sphi 0, %s182
      %s199 = sphi 0, %s183
    $region4: #{tpu_custom_call.1} parent=1 // loop_header_branch
      %20 = sbr.rel (%p18) target = $region8
    $region5: #{tpu_custom_call.1} parent=1 // loop_body
      %s22 = ssub.s32 %s17, 1
      %s23 = ssub.s32 %s17, 2
      %s24 = sadd.s32 %s17, 1
      %s25 = ssub.s32 %s17, %s24
      %p26 = scmp.eq.s32.totalorder %s25, 0
      %s28 = sadd.s32 %s27, 1
      %s29 = scalar_select %p26, %s27, %s28
      %p32 = pneg %p26
      %p33 = scmp.eq.s32.totalorder %s17, 1
      %p34 = por %p32, %p33
      %p35 = scmp.ne.s32.totalorder %s27, %s30
      %p36 = scmp.eq.s32.totalorder %s17, 0
      %p37 = por %p35, %p36
      %p38 = scmp.ne.s32.totalorder %s27, %s30
      %p39 = scmp.eq.s32.totalorder %s22, 1
      %p40 = por %p38, %p39
      %p41 = scmp.ne.s32.totalorder %s30, %s31
      %p42 = scmp.eq.s32.totalorder %s22, 0
      %p43 = por %p41, %p42
      %p44 = scmp.ne.s32.totalorder %s30, %s31
      %p45 = scmp.eq.s32.totalorder %s23, 1
      %p46 = por %p44, %p45
      %p48 = scmp.ne.s32.totalorder %s31, %s47
      %p49 = scmp.eq.s32.totalorder %s23, 0
      %p50 = por %p48, %p49
      %s52 = sadd.s32 %s51, 1
      %p55 = scmp.eq.s32.totalorder %s17, 1
      %p56 = scmp.ne.s32.totalorder %s51, %s53
      %p57 = scmp.eq.s32.totalorder %s17, 0
      %p58 = por %p56, %p57
      %p59 = scmp.ne.s32.totalorder %s51, %s53
      %p60 = scmp.eq.s32.totalorder %s22, 1
      %p61 = por %p59, %p60
      %p62 = scmp.ne.s32.totalorder %s53, %s54
      %p63 = scmp.eq.s32.totalorder %s22, 0
      %p64 = por %p62, %p63
      %p65 = scmp.ne.s32.totalorder %s53, %s54
      %p66 = scmp.eq.s32.totalorder %s23, 1
      %p67 = por %p65, %p66
      %p69 = scmp.ne.s32.totalorder %s54, %s68
      %p70 = scmp.eq.s32.totalorder %s23, 0
      %p71 = por %p69, %p70
      %s73 = sadd.s32 %s72, 1
      %p76 = scmp.eq.s32.totalorder %s17, 1
      %p77 = scmp.ne.s32.totalorder %s72, %s74
      %p78 = scmp.eq.s32.totalorder %s17, 0
      %p79 = por %p77, %p78
      %p80 = scmp.ne.s32.totalorder %s72, %s74
      %p81 = scmp.eq.s32.totalorder %s22, 1
      %p82 = por %p80, %p81
      %p83 = scmp.ne.s32.totalorder %s74, %s75
      %p84 = scmp.eq.s32.totalorder %s22, 0
      %p85 = por %p83, %p84
      %p86 = scmp.ne.s32.totalorder %s74, %s75
      %p87 = scmp.eq.s32.totalorder %s23, 1
      %p88 = por %p86, %p87
      %p90 = scmp.ne.s32.totalorder %s75, %s89
      %p91 = scmp.eq.s32.totalorder %s23, 0
      %p92 = por %p90, %p91
      %s94 = sadd.s32 %s93, 1
      %p97 = scmp.eq.s32.totalorder %s17, 1
      %p98 = scmp.ne.s32.totalorder %s93, %s95
      %p99 = scmp.eq.s32.totalorder %s17, 0
      %p100 = por %p98, %p99
      %p101 = scmp.ne.s32.totalorder %s93, %s95
      %p102 = scmp.eq.s32.totalorder %s22, 1
      %p103 = por %p101, %p102
      %p104 = scmp.ne.s32.totalorder %s95, %s96
      %p105 = scmp.eq.s32.totalorder %s22, 0
      %p106 = por %p104, %p105
      %p107 = scmp.ne.s32.totalorder %s95, %s96
      %p108 = scmp.eq.s32.totalorder %s23, 1
      %p109 = por %p107, %p108
      %p111 = scmp.ne.s32.totalorder %s96, %s110
      %p112 = scmp.eq.s32.totalorder %s23, 0
      %p113 = por %p111, %p112
      %s115 = sadd.s32 %s114, 1
      %p118 = scmp.eq.s32.totalorder %s17, 1
      %p119 = scmp.ne.s32.totalorder %s114, %s116
      %p120 = scmp.eq.s32.totalorder %s17, 0
      %p121 = por %p119, %p120
      %p122 = scmp.ne.s32.totalorder %s114, %s116
      %p123 = scmp.eq.s32.totalorder %s22, 1
      %p124 = por %p122, %p123
      %p125 = scmp.ne.s32.totalorder %s116, %s117
      %p126 = scmp.eq.s32.totalorder %s22, 0
      %p127 = por %p125, %p126
      %p128 = scmp.ne.s32.totalorder %s116, %s117
      %p129 = scmp.eq.s32.totalorder %s23, 1
      %p130 = por %p128, %p129
      %p132 = scmp.ne.s32.totalorder %s117, %s131
      %p133 = scmp.eq.s32.totalorder %s23, 0
      %p134 = por %p132, %p133
      %s136 = sadd.s32 %s135, 1
      %p139 = scmp.eq.s32.totalorder %s17, 1
      %p140 = scmp.ne.s32.totalorder %s135, %s137
      %p141 = scmp.eq.s32.totalorder %s17, 0
      %p142 = por %p140, %p141
      %p143 = scmp.ne.s32.totalorder %s135, %s137
      %p144 = scmp.eq.s32.totalorder %s22, 1
      %p145 = por %p143, %p144
      %p146 = scmp.ne.s32.totalorder %s137, %s138
      %p147 = scmp.eq.s32.totalorder %s22, 0
      %p148 = por %p146, %p147
      %p149 = scmp.ne.s32.totalorder %s137, %s138
      %p150 = scmp.eq.s32.totalorder %s23, 1
      %p151 = por %p149, %p150
      %p153 = scmp.ne.s32.totalorder %s138, %s152
      %p154 = scmp.eq.s32.totalorder %s23, 0
      %p155 = por %p153, %p154
      %s157 = sadd.s32 %s156, 1
      %p160 = scmp.eq.s32.totalorder %s17, 1
      %p161 = scmp.ne.s32.totalorder %s156, %s158
      %p162 = scmp.eq.s32.totalorder %s17, 0
      %p163 = por %p161, %p162
      %p164 = scmp.ne.s32.totalorder %s156, %s158
      %p165 = scmp.eq.s32.totalorder %s22, 1
      %p166 = por %p164, %p165
      %p167 = scmp.ne.s32.totalorder %s158, %s159
      %p168 = scmp.eq.s32.totalorder %s22, 0
      %p169 = por %p167, %p168
      %p170 = scmp.ne.s32.totalorder %s158, %s159
      %p171 = scmp.eq.s32.totalorder %s23, 1
      %p172 = por %p170, %p171
      %p174 = scmp.ne.s32.totalorder %s159, %s173
      %p175 = scmp.eq.s32.totalorder %s23, 0
      %p176 = por %p174, %p175
      %s177 = ssub.s32 %s17, %s24
      %p178 = scmp.eq.s32.totalorder %s177, 0
      %s180 = sadd.s32 %s179, 1
      %s181 = scalar_select %p178, %s179, %s180
      %p184 = pneg %p178
      %p185 = scmp.eq.s32.totalorder %s17, 1
      %p186 = por %p184, %p185
      %p187 = scmp.ne.s32.totalorder %s179, %s182
      %p188 = scmp.eq.s32.totalorder %s17, 0
      %p189 = por %p187, %p188
      %p190 = scmp.ne.s32.totalorder %s179, %s182
      %p191 = scmp.eq.s32.totalorder %s22, 1
      %p192 = por %p190, %p191
      %p193 = scmp.ne.s32.totalorder %s182, %s183
      %p194 = scmp.eq.s32.totalorder %s22, 0
      %p195 = por %p193, %p194
      %p196 = scmp.ne.s32.totalorder %s182, %s183
      %p197 = scmp.eq.s32.totalorder %s23, 1
      %p198 = por %p196, %p197
      %p200 = scmp.ne.s32.totalorder %s183, %s199
      %p201 = scmp.eq.s32.totalorder %s23, 0
      %p202 = por %p200, %p201
      %p203 = scmp.le.s32.totalorder 1, %s17
      %p204 = scmp.lt.s32.totalorder %s17, 3
      %p205 = pnand %p203, %p204
      %p206 = pneg %p205
      // Predicated region
      $region9: #{tpu_custom_call.1} parent=5 // pred_check
        _
      $region10: #{tpu_custom_call.1} parent=5 // pred_check_branch
        %208 = sbr.rel (%p205) target = $region12
      $region11: #{tpu_custom_call.1} parent=5 // pred_region
        %s209 = ssub.s32 %s17, 1
        // Predicated region
        $region13: #{tpu_custom_call.1} parent=11 // pred_check
          %p210 = pneg %p64
        $region14: #{tpu_custom_call.1} parent=11 // pred_check_branch
          %212 = sbr.rel (%p210) target = $region16
        $region15: #{tpu_custom_call.1} parent=11 // pred_region
          _
        $region16: #{tpu_custom_call.1} parent=11 // pred_fallthru
          _
        // Predicated region
        $region17: #{tpu_custom_call.1} parent=11 // pred_check
          %p213 = pneg %p85
        $region18: #{tpu_custom_call.1} parent=11 // pred_check_branch
          %215 = sbr.rel (%p213) target = $region20
        $region19: #{tpu_custom_call.1} parent=11 // pred_region
          _
        $region20: #{tpu_custom_call.1} parent=11 // pred_fallthru
          _
        // Predicated region
        $region21: #{tpu_custom_call.1} parent=11 // pred_check
          %p216 = pneg %p106
        $region22: #{tpu_custom_call.1} parent=11 // pred_check_branch
          %218 = sbr.rel (%p216) target = $region24
        $region23: #{tpu_custom_call.1} parent=11 // pred_region
          _
        $region24: #{tpu_custom_call.1} parent=11 // pred_fallthru
          _
        // Predicated region
        $region25: #{tpu_custom_call.1} parent=11 // pred_check
          %p219 = pneg %p127
        $region26: #{tpu_custom_call.1} parent=11 // pred_check_branch
          %221 = sbr.rel (%p219) target = $region28
        $region27: #{tpu_custom_call.1} parent=11 // pred_region
          _
        $region28: #{tpu_custom_call.1} parent=11 // pred_fallthru
          _
        // Predicated region
        $region29: #{tpu_custom_call.1} parent=11 // pred_check
          %p222 = pneg %p148
        $region30: #{tpu_custom_call.1} parent=11 // pred_check_branch
          %224 = sbr.rel (%p222) target = $region32
        $region31: #{tpu_custom_call.1} parent=11 // pred_region
          _
        $region32: #{tpu_custom_call.1} parent=11 // pred_fallthru
          _
        // Predicated region
        $region33: #{tpu_custom_call.1} parent=11 // pred_check
          %p225 = pneg %p169
        $region34: #{tpu_custom_call.1} parent=11 // pred_check_branch
          %227 = sbr.rel (%p225) target = $region36
        $region35: #{tpu_custom_call.1} parent=11 // pred_region
          _
        $region36: #{tpu_custom_call.1} parent=11 // pred_fallthru
          _
      $region12: #{tpu_custom_call.1} parent=5 // pred_fallthru
        _
      %p228 = scmp.lt.s32.totalorder %s17, 2
      // Predicated region
      $region37: #{tpu_custom_call.1} parent=5 // pred_check
        %p229 = pneg %p228
      $region38: #{tpu_custom_call.1} parent=5 // pred_check_branch
        %231 = sbr.rel (%p229) target = $region40
      $region39: #{tpu_custom_call.1} parent=5 // pred_region
        // Predicated region
        $region41: #{tpu_custom_call.1} parent=39 // pred_check
          %p232 = pneg %p37
        $region42: #{tpu_custom_call.1} parent=39 // pred_check_branch
          %234 = sbr.rel (%p232) target = $region44
        $region43: #{tpu_custom_call.1} parent=39 // pred_region
          %p235 = scmp.lt.s32.totalorder %s17, 1
          %s236 = scalar_select %p235, %s17, 1
          %s237 = smul.addr %s236, 8
          %s238 = smul.addr %s237, 8
          %s239 = scalar_lea.vmem %s0, %s238
        $region44: #{tpu_custom_call.1} parent=39 // pred_fallthru
          _
      $region40: #{tpu_custom_call.1} parent=5 // pred_fallthru
        _
      %p240 = scmp.le.s32.totalorder 1, %s17
      %p241 = scmp.lt.s32.totalorder %s17, 3
      %p242 = pnand %p240, %p241
      %p243 = pneg %p242
      // Predicated region
      $region45: #{tpu_custom_call.1} parent=5 // pred_check
        _
      $region46: #{tpu_custom_call.1} parent=5 // pred_check_branch
        %245 = sbr.rel (%p242) target = $region48
      $region47: #{tpu_custom_call.1} parent=5 // pred_region
        %s246 = ssub.s32 %s17, 1
        %p247 = scmp.lt.s32.totalorder %s22, 1
        %s248 = scalar_select %p247, %s22, 1
        %s249 = smul.addr %s248, 8
        %s250 = smul.addr %s249, 8
        %s251 = scalar_lea.vmem %s0, %s250
        %p252 = pneg %p43
        %p253 = pneg %p40
        %p254 = pneg %p64
        %p255 = pneg %p61
        %p256 = pneg %p85
        %p257 = pneg %p82
        %p258 = pneg %p106
        %p259 = pneg %p103
        %p260 = pneg %p127
        %p261 = pneg %p124
        %p262 = pneg %p148
        %p263 = pneg %p145
        %p264 = pneg %p169
        %p265 = pneg %p166
        %p266 = pneg %p195
        %p267 = pneg %p192
        %s268 = sand.u32 %s182, 1
        %s269 = scalar_lea.sflag [#allocation4], %s268
        %s270 = sand.u32 %s182, 1
        %s271 = smul.addr %s270, 64
        %s272 = scalar_lea.vmem [#allocation3], %s271
        %p273 = scmp.lt.s32.totalorder %s22, 1
        %s274 = scalar_select %p273, %s22, 1
        %s275 = smul.addr %s274, 8
        %s276 = smul.addr %s275, 8
        %s277 = scalar_lea.vmem %s0, %s276
        %v278 = vld [vmem:[%s277] sm:$0xff]
        %v279 = vld [vmem:[%s277 + $0x8] sm:$0xff]
        %v280 = vld [vmem:[%s277 + $0x10] sm:$0xff]
        %v281 = vld [vmem:[%s277 + $0x18] sm:$0xff]
        %v282 = vld [vmem:[%s277 + $0x20] sm:$0xff]
        %v283 = vld [vmem:[%s277 + $0x28] sm:$0xff]
        %v284 = vld [vmem:[%s277 + $0x30] sm:$0xff]
        %v285 = vld [vmem:[%s277 + $0x38] sm:$0xff]
        %v286 = vadd.f32 %v278, %v279
        %287 = vadd.xlane.f32.xlu0 %v286
        %v288 = vpop.xlane.xlu0 %287
        %v289 = vadd.f32 %v280, %v281
        %290 = vadd.xlane.f32.xlu0 %v289
        %v291 = vpop.xlane.xlu0 %290
        %v292 = vadd.f32 %v282, %v283
        %293 = vadd.xlane.f32.xlu0 %v292
        %v294 = vpop.xlane.xlu0 %293
        %v295 = vadd.f32 %v284, %v285
        %296 = vadd.xlane.f32.xlu0 %v295
        %v297 = vpop.xlane.xlu0 %296
        %v298 = vrcp.pop 256.0
        %v299 = vmul.f32 %v288, %v298
        %v300 = vmul.f32 %v291, %v298
        %v301 = vmul.f32 %v294, %v298
        %v302 = vmul.f32 %v297, %v298
        %v303 = vld [vmem:[%s1] sm:$0xff]
        %v304 = vld [vmem:[%s1 + $0x8] sm:$0xff]
        %v305 = vld [vmem:[%s1 + $0x10] sm:$0xff]
        %v306 = vld [vmem:[%s1 + $0x18] sm:$0xff]
        %v307 = vmul.f32 %v299, %v303
        %v308 = vmul.f32 %v300, %v304
        %v309 = vmul.f32 %v301, %v305
        %v310 = vmul.f32 %v302, %v306
        %vm311 = vcmask 15360
        %v312 = vsel %vm311, %v307, 0.0
        %v313 = vsel %vm311, %v308, 0.0
        %v314 = vadd.f32 %v312, %v313
        %v315 = vsel %vm311, %v309, 0.0
        %v316 = vadd.f32 %v314, %v315
        %v317 = vsel %vm311, %v310, 0.0
        %v318 = vadd.f32 %v316, %v317
        %v319 = vrot.slane %v318, 4
        %v320 = vadd.f32 %v318, %v319
        %v321 = vrot.slane %v320, 2
        %v322 = vadd.f32 %v320, %v321
        %v323 = vrot.slane %v322, 1
        %v324 = vadd.f32 %v322, %v323
        %v325 = vld [vmem:[%s2] sm:$0x1]
        %v326 = vadd.f32 %v324, %v325
        %v327 = vmax.f32 %v326, 0.0
        %v328 = vld [vmem:[%s3] sm:$0xff]
        %v329 = vld [vmem:[%s3 + $0x8] sm:$0xff]
        %v330 = vld [vmem:[%s3 + $0x10] sm:$0xff]
        %v331 = vld [vmem:[%s3 + $0x18] sm:$0xff]
        %v332 = vlaneseq
        %v333 = vshrl.u32 %v332, 7
        %v334 = vsub.s32 0, %v333
        %v335 = vrot.slane %v327, %v334
        %v336 = vmul.f32 %v328, %v335
        %v337 = vmul.f32 %v329, %v335
        %v338 = vmul.f32 %v330, %v335
        %v339 = vmul.f32 %v331, %v335
        %v340 = vsel %vm311, %v336, 0.0
        %341 = vadd.xlane.f32.xlu0 %v340
        %v342 = vpop.xlane.xlu0 %341
        %v343 = vsel %vm311, %v337, 0.0
        %344 = vadd.xlane.f32.xlu0 %v343
        %v345 = vpop.xlane.xlu0 %344
        %v346 = vsel %vm311, %v338, 0.0
        %347 = vadd.xlane.f32.xlu0 %v346
        %v348 = vpop.xlane.xlu0 %347
        %v349 = vsel %vm311, %v339, 0.0
        %350 = vadd.xlane.f32.xlu0 %v349
        %v351 = vpop.xlane.xlu0 %350
        %v352 = vld [vmem:[%s4] sm:$0xff]
        %v353 = vld [vmem:[%s4 + $0x8] sm:$0xff]
        %v354 = vld [vmem:[%s4 + $0x10] sm:$0xff]
        %v355 = vld [vmem:[%s4 + $0x18] sm:$0xff]
        %v356 = vadd.f32 %v342, %v352
        %v357 = vadd.f32 %v345, %v353
        %v358 = vadd.f32 %v348, %v354
        %v359 = vadd.f32 %v351, %v355
        %v360 = vxor.u32 %v356, 2147483648
        %v361 = vxor.u32 %v357, 2147483648
        %v362 = vxor.u32 %v358, 2147483648
        %v363 = vxor.u32 %v359, 2147483648
        %v364 = vmul.f32 %v360, 1.442695
        %v365 = vpow.pop %v364
        %v366 = vmul.f32 %v361, 1.442695
        %v367 = vpow.pop %v366
        %v368 = vmul.f32 %v362, 1.442695
        %v369 = vpow.pop %v368
        %v370 = vmul.f32 %v363, 1.442695
        %v371 = vpow.pop %v370
        %v372 = vadd.f32 %v365, 1.0
        %v373 = vadd.f32 %v367, 1.0
        %v374 = vadd.f32 %v369, 1.0
        %v375 = vadd.f32 %v371, 1.0
        %v376 = vrcp.pop %v372
        %v377 = vmul.f32 1.0, %v376
        %v378 = vrcp.pop %v373
        %v379 = vmul.f32 1.0, %v378
        %v380 = vrcp.pop %v374
        %v381 = vmul.f32 1.0, %v380
        %v382 = vrcp.pop %v375
        %v383 = vmul.f32 1.0, %v382
        %v384 = vld [vmem:[%s5] sm:$0xff]
        %v385 = vld [vmem:[%s5 + $0x8] sm:$0xff]
        %v386 = vld [vmem:[%s5 + $0x10] sm:$0xff]
        %v387 = vld [vmem:[%s5 + $0x18] sm:$0xff]
        %389 = vset.pattern.permute.xlu0 0
        %390 = vperm.xlu0 %389, %v384
        %v391 = vpop.permute.xlu0 %390
        %394 = vset.pattern.permute.xlu0 0
        %395 = vperm.xlu0 %394, %v385
        %v396 = vpop.permute.xlu0 %395
        %399 = vset.pattern.permute.xlu0 0
        %400 = vperm.xlu0 %399, %v386
        %v401 = vpop.permute.xlu0 %400
        %404 = vset.pattern.permute.xlu0 0
        %405 = vperm.xlu0 %404, %v387
        %v406 = vpop.permute.xlu0 %405
        %v408 = vmul.f32 %v278, %v391
        %v409 = vmul.f32 %v279, %v391
        %v410 = vmul.f32 %v280, %v396
        %v411 = vmul.f32 %v281, %v396
        %v412 = vmul.f32 %v282, %v401
        %v413 = vmul.f32 %v283, %v401
        %v414 = vmul.f32 %v284, %v406
        %v415 = vmul.f32 %v285, %v406
        %v416 = vadd.f32 %v408, %v410
        %v417 = vadd.f32 %v416, %v412
        %v418 = vadd.f32 %v417, %v414
        %v419 = vrot.slane %v418, 4
        %v420 = vadd.f32 %v418, %v419
        %v421 = vrot.slane %v420, 2
        %v422 = vadd.f32 %v420, %v421
        %v423 = vrot.slane %v422, 1
        %v424 = vadd.f32 %v422, %v423
        %v425 = vadd.f32 %v409, %v411
        %v426 = vadd.f32 %v425, %v413
        %v427 = vadd.f32 %v426, %v415
        %v428 = vrot.slane %v427, 4
        %v429 = vadd.f32 %v427, %v428
        %v430 = vrot.slane %v429, 2
        %v431 = vadd.f32 %v429, %v430
        %v432 = vrot.slane %v431, 1
        %v433 = vadd.f32 %v431, %v432
        %s434 = sld [smem:[#allocation2]]
        %v435 = vstv %s434
        %v436 = vadd.f32 %v424, %v435
        %v437 = vadd.f32 %v433, %v435
        %v438 = vxor.u32 %v436, 2147483648
        %v439 = vxor.u32 %v437, 2147483648
        %v440 = vmul.f32 %v438, 1.442695
        %v441 = vpow.pop %v440
        %v442 = vmul.f32 %v439, 1.442695
        %v443 = vpow.pop %v442
        %v444 = vadd.f32 %v441, 1.0
        %v445 = vadd.f32 %v443, 1.0
        %v446 = vrcp.pop %v444
        %v447 = vmul.f32 1.0, %v446
        %v448 = vrcp.pop %v445
        %v449 = vmul.f32 1.0, %v448
        %451 = vset.pattern.permute.xlu0 0
        %452 = vperm.xlu0 %451, %v377
        %v453 = vpop.permute.xlu0 %452
        %456 = vset.pattern.permute.xlu0 0
        %457 = vperm.xlu0 %456, %v379
        %v458 = vpop.permute.xlu0 %457
        %461 = vset.pattern.permute.xlu0 0
        %462 = vperm.xlu0 %461, %v381
        %v463 = vpop.permute.xlu0 %462
        %466 = vset.pattern.permute.xlu0 0
        %467 = vperm.xlu0 %466, %v383
        %v468 = vpop.permute.xlu0 %467
        %v470 = vadd.f32 %v453, %v447
        %v471 = vadd.f32 %v453, %v449
        %v472 = vadd.f32 %v458, %v447
        %v473 = vadd.f32 %v458, %v449
        %v474 = vadd.f32 %v463, %v447
        %v475 = vadd.f32 %v463, %v449
        %v476 = vadd.f32 %v468, %v447
        %v477 = vadd.f32 %v468, %v449
        %v478 = vmul.f32 %v278, %v470
        %v479 = vmul.f32 %v279, %v471
        %v480 = vmul.f32 %v280, %v472
        %v481 = vmul.f32 %v281, %v473
        %v482 = vmul.f32 %v282, %v474
        %v483 = vmul.f32 %v283, %v475
        %v484 = vmul.f32 %v284, %v476
        %v485 = vmul.f32 %v285, %v477
        %486 = vst [vmem:[%s272] sm:$0xff] %v478
        %487 = vst [vmem:[%s272 + $0x8] sm:$0xff] %v479
        %488 = vst [vmem:[%s272 + $0x10] sm:$0xff] %v480
        %489 = vst [vmem:[%s272 + $0x18] sm:$0xff] %v481
        %490 = vst [vmem:[%s272 + $0x20] sm:$0xff] %v482
        %491 = vst [vmem:[%s272 + $0x28] sm:$0xff] %v483
        %492 = vst [vmem:[%s272 + $0x30] sm:$0xff] %v484
        %493 = vst [vmem:[%s272 + $0x38] sm:$0xff] %v485
        %s494 = sand.u32 %s182, 1
        %s495 = scalar_lea.sflag [#allocation4], %s494
        %s496 = sand.u32 %s182, 1
        %s497 = smul.addr %s496, 64
        %s498 = scalar_lea.vmem [#allocation3], %s497
        // Predicated region
        $region49: #{tpu_custom_call.1} parent=47 // pred_check
          %p499 = pneg %p192
        $region50: #{tpu_custom_call.1} parent=47 // pred_check_branch
          %501 = sbr.rel (%p499) target = $region52
        $region51: #{tpu_custom_call.1} parent=47 // pred_region
          %s503 = ssub.s32 1024, 1024
          %504 = vsyncadd %s495, %s503
          %s505 = smul.addr %s22, 8
          %s506 = smul.addr %s505, 128
          %s507 = scalar_lea.hbm %s7, %s506
          %s508 = sshll.u32 %s498, 4
          %s509 = int_to_ptr.vmem [resolvable:$true] %s508
          %514 = dma.vmem_to_hbm [thread:$0]  %s509, 1024, %s507, %s495, 256, 256, 16
        $region52: #{tpu_custom_call.1} parent=47 // pred_fallthru
          _
      $region48: #{tpu_custom_call.1} parent=5 // pred_fallthru
        _
      %p515 = scmp.le.s32.totalorder 2, %s17
      // Predicated region
      $region53: #{tpu_custom_call.1} parent=5 // pred_check
        %p516 = pneg %p515
      $region54: #{tpu_custom_call.1} parent=5 // pred_check_branch
        %518 = sbr.rel (%p516) target = $region56
      $region55: #{tpu_custom_call.1} parent=5 // pred_region
        %s519 = ssub.s32 %s17, 2
        // Predicated region
        $region57: #{tpu_custom_call.1} parent=55 // pred_check
          %p520 = pneg %p198
        $region58: #{tpu_custom_call.1} parent=55 // pred_check_branch
          %522 = sbr.rel (%p520) target = $region60
        $region59: #{tpu_custom_call.1} parent=55 // pred_region
          %s523 = sand.u32 %s183, 1
          %s524 = scalar_lea.sflag [#allocation4], %s523
          %s525 = sand.u32 %s183, 1
          %s526 = smul.addr %s525, 64
          %s527 = scalar_lea.vmem [#allocation3], %s526
          %528 = dma.done %s524, 1024
        $region60: #{tpu_custom_call.1} parent=55 // pred_fallthru
          _
      $region56: #{tpu_custom_call.1} parent=5 // pred_fallthru
        _
    $region6: #{tpu_custom_call.1} parent=1 // loop_footer
      %s21 = sadd.s32 1, %s17
    $region7: #{tpu_custom_call.1} parent=1 // loop_footer_branch
      %16 = sbr.rel target = $region3
    $region8: #{tpu_custom_call.1} parent=1 // loop_exit
      _
    %529 = vsyncpa [#allocation4], 1
    %s530 = scalar_lea.sflag [#allocation4], 1
    %531 = vsyncpa %s530, 1

</llo_original>
